<compile_context>
chip_gen: v5e
topology: v5e:2x2
jax: 0.10.0
libtpu: 0.0.40
codegen_flags: <defaults>
</compile_context>

<pallas_src>
import functools

import jax
import jax.numpy as jnp
from jax.experimental import pallas as pl
from jax.experimental.pallas import tpu as pltpu

LEAKY_SLOPE = 0.01


def _prob_model_kernel(n_layers, x_ref, nd_ref, *rest):
    """One batch tile of the full MLP forward pass.

    rest = (w0x, w0n, b0, w1, b1, ..., w{L-1}, b{L-1}, out_ref)
    where w0x / w0n are the first-layer weight split along its input dim
    (cnn features / new_data features) so no lane-axis concat is needed.
    """
    out_ref = rest[-1]
    params = rest[:-1]

    # --- layer 0: split matmul replaces torch.cat((x, new_data), dim=1) ---
    w0x = params[0][...]            # (cnn_dim, h0)  bf16
    w0n = params[1][...]            # (nd_dim, h0)   bf16
    b0 = params[2][...]             # (1, h0)        f32
    h = (jnp.dot(x_ref[...], w0x, preferred_element_type=jnp.float32)
         + jnp.dot(nd_ref[...], w0n, preferred_element_type=jnp.float32)
         + b0)
    if n_layers > 1:
        h = jnp.where(h > 0, h, LEAKY_SLOPE * h)    # LeakyReLU(0.01)

    # --- remaining layers (f32 accumulation, bf16 MXU operands) ---
    idx = 3
    for i in range(1, n_layers):
        w = params[idx][...]        # (in_i, out_i)  bf16
        b = params[idx + 1][...]    # (1, out_i)     f32
        idx += 2
        h = jnp.dot(h.astype(w.dtype), w,
                    preferred_element_type=jnp.float32) + b
        if i < n_layers - 1:
            h = jnp.where(h > 0, h, LEAKY_SLOPE * h)
        # Dropout -> identity (eval mode)

    # Sigmoid: exp on EUP, approx reciprocal on EUP (VALU stays free).
    out_ref[...] = pl.reciprocal(1.0 + jnp.exp(-h), approx=True)


def _choose_tile_m(batch, tile_m):
    """Batch tile: multiple of 8; even tile count (>=2) for megacore."""
    if batch <= 8:
        return 8
    n_tiles = max(2, pl.cdiv(batch, tile_m))
    if n_tiles % 2:
        n_tiles += 1                       # even split across 2 TCs (v7x)
    tm = ((pl.cdiv(batch, n_tiles) + 7) // 8) * 8
    return max(tm, 8)


def prob_model_forward(x, new_data, weights, biases, *, tile_m=2048,
                       compute_dtype=jnp.bfloat16):
    """x: (B, cnn_dim), new_data: (B, nd_dim).

    weights[i]: (in_i, out_i), biases[i]: (1, out_i). Returns (B, 8) probs.
    """
    n_layers = len(weights)
    batch = x.shape[0]
    cnn_dim = x.shape[1]
    nd_dim = new_data.shape[1]
    out_dim = weights[-1].shape[1]

    w0 = weights[0]
    assert w0.shape[0] == cnn_dim + nd_dim

    # Stream activations / weights in bf16; biases (and accumulation) stay f32.
    x_c = x.astype(compute_dtype)
    nd_c = new_data.astype(compute_dtype)
    flat_params = [w0[:cnn_dim, :].astype(compute_dtype),
                   w0[cnn_dim:, :].astype(compute_dtype),
                   biases[0].astype(jnp.float32)]
    for w, b in zip(weights[1:], biases[1:]):
        flat_params.append(w.astype(compute_dtype))
        flat_params.append(b.astype(jnp.float32))

    tm = _choose_tile_m(batch, tile_m)
    n_tiles = pl.cdiv(batch, tm)

    kernel = functools.partial(_prob_model_kernel, n_layers)

    # Activations: tiled along batch (ragged last tile OK -> no jnp.pad).
    # Params: full block, constant index_map -> fetched once, VMEM-resident.
    act_in_specs = [
        pl.BlockSpec((tm, cnn_dim), lambda i: (i, 0)),
        pl.BlockSpec((tm, nd_dim), lambda i: (i, 0)),
    ]
    param_specs = [pl.BlockSpec(p.shape, lambda i: (0, 0)) for p in flat_params]
    out_spec = pl.BlockSpec((tm, out_dim), lambda i: (i, 0))

    flops = 2 * batch * sum(int(w.shape[0]) * int(w.shape[1]) for w in weights)
    in_bytes = batch * (cnn_dim + nd_dim) * jnp.dtype(compute_dtype).itemsize
    param_bytes = sum(int(p.size) * p.dtype.itemsize for p in flat_params)
    out_bytes = batch * out_dim * 4
    cost = pl.CostEstimate(
        flops=flops,
        transcendentals=batch * out_dim,
        bytes_accessed=in_bytes + param_bytes + out_bytes,
    )

    out = pl.pallas_call(
        kernel,
        out_shape=jax.ShapeDtypeStruct((batch, out_dim), jnp.float32),
        grid=(n_tiles,),
        in_specs=act_in_specs + param_specs,
        out_specs=out_spec,
        compiler_params=pltpu.CompilerParams(
            dimension_semantics=("parallel",)),
        cost_estimate=cost,
    )(x_c, nd_c, *flat_params)

    return out


def prob_model_ref(x, new_data, weights, biases):
    """Pure-JAX reference mirroring the PyTorch module (eval mode, f32)."""
    h = jnp.concatenate([x, new_data], axis=1)
    for i, (w, b) in enumerate(zip(weights, biases)):
        h = h @ w + b
        if i < len(weights) - 1:
            h = jnp.where(h > 0, h, LEAKY_SLOPE * h)
    return jax.nn.sigmoid(h)


def init_params(key, layer_dims):
    """Deterministic PyTorch-Linear-style init: U(-1/sqrt(in), 1/sqrt(in))."""
    weights, biases = [], []
    for i in range(len(layer_dims) - 1):
        fan_in, fan_out = layer_dims[i], layer_dims[i + 1]
        key, kw, kb = jax.random.split(key, 3)
        bound = 1.0 / (fan_in ** 0.5)
        w = jax.random.uniform(kw, (fan_in, fan_out), jnp.float32, -bound, bound)
        b = jax.random.uniform(kb, (1, fan_out), jnp.float32, -bound, bound)
        weights.append(w)
        biases.append(b)
    return weights, biases


if __name__ == "__main__":
    # Module-consistent config:
    #   cnn_features_size = 32, args.linears = [64, 32], args.dropouts = [0.5, 0.0]
    #   => layer dims: [32 + 19, 64, 32, 8]
    cnn_features_size = 32
    hidden_linears = [64, 32]
    layer_dims = [cnn_features_size + 19] + hidden_linears + [8]

    key = jax.random.PRNGKey(0)
    key, kparam = jax.random.split(key)
    weights, biases = init_params(kparam, layer_dims)

    # Test 1: tiny batch (single tile).
    batch = 8
    key, kx, kn = jax.random.split(key, 3)
    x = jax.random.normal(kx, (batch, cnn_features_size), jnp.float32)
    new_data = jax.random.normal(kn, (batch, 19), jnp.float32)

    out = jax.block_until_ready(prob_model_forward(x, new_data, weights, biases))
    ref = prob_model_ref(x, new_data, weights, biases)
    assert out.shape == (batch, 8), out.shape
    assert bool(jnp.all((out >= -1e-3) & (out <= 1.0 + 1e-3)))
    assert bool(jnp.allclose(out, ref, atol=2e-2, rtol=2e-2))

    # Test 2: non-multiple batch + multi-tile grid (exercises the ragged
    # final block / masked-store path with no wrapper-side padding; even
    # tile count for megacore).
    batch2 = 300
    key, kx2, kn2 = jax.random.split(key, 3)
    x2 = jax.random.normal(kx2, (batch2, cnn_features_size), jnp.float32)
    nd2 = jax.random.normal(kn2, (batch2, 19), jnp.float32)

    out2 = jax.block_until_ready(
        prob_model_forward(x2, nd2, weights, biases, tile_m=128))
    ref2 = prob_model_ref(x2, nd2, weights, biases)
    assert out2.shape == (batch2, 8), out2.shape
    assert bool(jnp.allclose(out2, ref2, atol=2e-2, rtol=2e-2))

    # Test 3: larger batch through the default (large-tile) path.
    batch3 = 5000
    key, kx3, kn3 = jax.random.split(key, 3)
    x3 = jax.random.normal(kx3, (batch3, cnn_features_size), jnp.float32)
    nd3 = jax.random.normal(kn3, (batch3, 19), jnp.float32)

    out3 = jax.block_until_ready(prob_model_forward(x3, nd3, weights, biases))
    ref3 = prob_model_ref(x3, nd3, weights, biases)
    assert out3.shape == (batch3, 8), out3.shape
    assert bool(jnp.allclose(out3, ref3, atol=2e-2, rtol=2e-2))

    print("KERNEL_OK")
</pallas_src>

<mosaic_0001>
module attributes {stable_mosaic.version = 11 : i64} {
  func.func @_prob_model_kernel(%arg0: i32, %arg1: memref<8x32xbf16, #tpu.memory_space<vmem>>, %arg2: memref<8x19xbf16, #tpu.memory_space<vmem>>, %arg3: memref<32x64xbf16, #tpu.memory_space<vmem>>, %arg4: memref<19x64xbf16, #tpu.memory_space<vmem>>, %arg5: memref<1x64xf32, #tpu.memory_space<vmem>>, %arg6: memref<64x32xbf16, #tpu.memory_space<vmem>>, %arg7: memref<1x32xf32, #tpu.memory_space<vmem>>, %arg8: memref<32x8xbf16, #tpu.memory_space<vmem>>, %arg9: memref<1x8xf32, #tpu.memory_space<vmem>>, %arg10: memref<8x8xf32, #tpu.memory_space<vmem>>) attributes {dimension_semantics = [#tpu.dimension_semantics<parallel>], iteration_bounds = array<i64: 1>, scalar_prefetch = 0 : i64, scratch_operands = 0 : i64, tpu.core_type = #tpu.core_type<tc>, window_params = [{transform_indices = @transform_0, window_bounds = array<i64: 8, 32>}, {transform_indices = @transform_1, window_bounds = array<i64: 8, 19>}, {pipeline_mode = #tpu.pipeline_mode<synchronous>, transform_indices = @transform_2, window_bounds = array<i64: 32, 64>}, {pipeline_mode = #tpu.pipeline_mode<synchronous>, transform_indices = @transform_3, window_bounds = array<i64: 19, 64>}, {pipeline_mode = #tpu.pipeline_mode<synchronous>, transform_indices = @transform_4, window_bounds = array<i64: 1, 64>}, {pipeline_mode = #tpu.pipeline_mode<synchronous>, transform_indices = @transform_5, window_bounds = array<i64: 64, 32>}, {pipeline_mode = #tpu.pipeline_mode<synchronous>, transform_indices = @transform_6, window_bounds = array<i64: 1, 32>}, {pipeline_mode = #tpu.pipeline_mode<synchronous>, transform_indices = @transform_7, window_bounds = array<i64: 32, 8>}, {pipeline_mode = #tpu.pipeline_mode<synchronous>, transform_indices = @transform_8, window_bounds = array<i64: 1, 8>}, {transform_indices = @transform_9, window_bounds = array<i64: 8, 8>}]} {
    %c0 = arith.constant 0 : index
    %c0_0 = arith.constant 0 : index
    %0 = vector.load %arg3[%c0, %c0_0] : memref<32x64xbf16, #tpu.memory_space<vmem>>, vector<32x64xbf16>
    %c0_1 = arith.constant 0 : index
    %c0_2 = arith.constant 0 : index
    %1 = vector.load %arg4[%c0_1, %c0_2] : memref<19x64xbf16, #tpu.memory_space<vmem>>, vector<19x64xbf16>
    %c0_3 = arith.constant 0 : index
    %c0_4 = arith.constant 0 : index
    %2 = vector.load %arg5[%c0_3, %c0_4] : memref<1x64xf32, #tpu.memory_space<vmem>>, vector<1x64xf32>
    %c0_5 = arith.constant 0 : index
    %c0_6 = arith.constant 0 : index
    %3 = vector.load %arg1[%c0_5, %c0_6] : memref<8x32xbf16, #tpu.memory_space<vmem>>, vector<8x32xbf16>
    %cst = arith.constant dense<0.000000e+00> : vector<8x64xf32>
    %4 = tpu.matmul %3, %0, %cst {dimension_numbers = #tpu.dot_dimension_numbers<[1], [0], [0], [1], [0, 0, 1, 1], [], []>} : vector<8x32xbf16>, vector<32x64xbf16>, vector<8x64xf32> -> vector<8x64xf32>
    %c0_7 = arith.constant 0 : index
    %c0_8 = arith.constant 0 : index
    %5 = vector.load %arg2[%c0_7, %c0_8] : memref<8x19xbf16, #tpu.memory_space<vmem>>, vector<8x19xbf16>
    %cst_9 = arith.constant dense<0.000000e+00> : vector<8x64xf32>
    %6 = tpu.matmul %5, %1, %cst_9 {dimension_numbers = #tpu.dot_dimension_numbers<[1], [0], [0], [1], [0, 0, 1, 1], [], []>} : vector<8x19xbf16>, vector<19x64xbf16>, vector<8x64xf32> -> vector<8x64xf32>
    %7 = arith.addf %4, %6 : vector<8x64xf32>
    %8 = vector.broadcast %2 : vector<1x64xf32> to vector<8x64xf32>
    %9 = arith.addf %7, %8 : vector<8x64xf32>
    %cst_10 = arith.constant 0.000000e+00 : f32
    %10 = vector.broadcast %cst_10 : f32 to vector<8x64xf32>
    %11 = arith.cmpf ogt, %9, %10 : vector<8x64xf32>
    %cst_11 = arith.constant 0.00999999977 : f32
    %12 = vector.broadcast %cst_11 : f32 to vector<8x64xf32>
    %13 = arith.mulf %12, %9 : vector<8x64xf32>
    %14 = arith.select %11, %9, %13 : vector<8x64xi1>, vector<8x64xf32>
    %c0_12 = arith.constant 0 : index
    %c0_13 = arith.constant 0 : index
    %15 = vector.load %arg6[%c0_12, %c0_13] : memref<64x32xbf16, #tpu.memory_space<vmem>>, vector<64x32xbf16>
    %c0_14 = arith.constant 0 : index
    %c0_15 = arith.constant 0 : index
    %16 = vector.load %arg7[%c0_14, %c0_15] : memref<1x32xf32, #tpu.memory_space<vmem>>, vector<1x32xf32>
    %17 = arith.truncf %14 : vector<8x64xf32> to vector<8x64xbf16>
    %cst_16 = arith.constant dense<0.000000e+00> : vector<8x32xf32>
    %18 = tpu.matmul %17, %15, %cst_16 {dimension_numbers = #tpu.dot_dimension_numbers<[1], [0], [0], [1], [0, 0, 1, 1], [], []>} : vector<8x64xbf16>, vector<64x32xbf16>, vector<8x32xf32> -> vector<8x32xf32>
    %19 = vector.broadcast %16 : vector<1x32xf32> to vector<8x32xf32>
    %20 = arith.addf %18, %19 : vector<8x32xf32>
    %cst_17 = arith.constant 0.000000e+00 : f32
    %21 = vector.broadcast %cst_17 : f32 to vector<8x32xf32>
    %22 = arith.cmpf ogt, %20, %21 : vector<8x32xf32>
    %cst_18 = arith.constant 0.00999999977 : f32
    %23 = vector.broadcast %cst_18 : f32 to vector<8x32xf32>
    %24 = arith.mulf %23, %20 : vector<8x32xf32>
    %25 = arith.select %22, %20, %24 : vector<8x32xi1>, vector<8x32xf32>
    %c0_19 = arith.constant 0 : index
    %c0_20 = arith.constant 0 : index
    %26 = vector.load %arg8[%c0_19, %c0_20] : memref<32x8xbf16, #tpu.memory_space<vmem>>, vector<32x8xbf16>
    %c0_21 = arith.constant 0 : index
    %c0_22 = arith.constant 0 : index
    %27 = vector.load %arg9[%c0_21, %c0_22] : memref<1x8xf32, #tpu.memory_space<vmem>>, vector<1x8xf32>
    %28 = arith.truncf %25 : vector<8x32xf32> to vector<8x32xbf16>
    %cst_23 = arith.constant dense<0.000000e+00> : vector<8x8xf32>
    %29 = tpu.matmul %28, %26, %cst_23 {dimension_numbers = #tpu.dot_dimension_numbers<[1], [0], [0], [1], [0, 0, 1, 1], [], []>} : vector<8x32xbf16>, vector<32x8xbf16>, vector<8x8xf32> -> vector<8x8xf32>
    %30 = vector.broadcast %27 : vector<1x8xf32> to vector<8x8xf32>
    %31 = arith.addf %29, %30 : vector<8x8xf32>
    %cst_24 = arith.constant 0.000000e+00 : f32
    %32 = vector.broadcast %cst_24 : f32 to vector<8x8xf32>
    %33 = arith.subf %32, %31 : vector<8x8xf32>
    %34 = math.exp %33 : vector<8x8xf32>
    %cst_25 = arith.constant 1.000000e+00 : f32
    %35 = vector.broadcast %cst_25 : f32 to vector<8x8xf32>
    %36 = arith.addf %35, %34 : vector<8x8xf32>
    %37 = tpu.reciprocal %36 {approx = true} : vector<8x8xf32> -> vector<8x8xf32>
    %c0_26 = arith.constant 0 : index
    %c0_27 = arith.constant 0 : index
    %38 = vector.load %arg10[%c0_26, %c0_27] : memref<8x8xf32, #tpu.memory_space<vmem>>, vector<8x8xf32>
    tpu.vector_store %arg10[%c0_26, %c0_27], %37 {strides = array<i32>} : memref<8x8xf32, #tpu.memory_space<vmem>>, vector<8x8xf32>,
    return
  }
  func.func @transform_0(%arg0: i32) -> (i32, i32) {
    %c0_i32 = arith.constant 0 : i32
    %c0_i32_0 = arith.constant 0 : i32
    return %arg0, %c0_i32 : i32, i32
  }
  func.func @transform_1(%arg0: i32) -> (i32, i32) {
    %c0_i32 = arith.constant 0 : i32
    %c0_i32_0 = arith.constant 0 : i32
    return %arg0, %c0_i32 : i32, i32
  }
  func.func @transform_2(%arg0: i32) -> (i32, i32) {
    %c0_i32 = arith.constant 0 : i32
    %c0_i32_0 = arith.constant 0 : i32
    %c0_i32_1 = arith.constant 0 : i32
    return %c0_i32, %c0_i32_0 : i32, i32
  }
  func.func @transform_3(%arg0: i32) -> (i32, i32) {
    %c0_i32 = arith.constant 0 : i32
    %c0_i32_0 = arith.constant 0 : i32
    %c0_i32_1 = arith.constant 0 : i32
    return %c0_i32, %c0_i32_0 : i32, i32
  }
  func.func @transform_4(%arg0: i32) -> (i32, i32) {
    %c0_i32 = arith.constant 0 : i32
    %c0_i32_0 = arith.constant 0 : i32
    %c0_i32_1 = arith.constant 0 : i32
    return %c0_i32, %c0_i32_0 : i32, i32
  }
  func.func @transform_5(%arg0: i32) -> (i32, i32) {
    %c0_i32 = arith.constant 0 : i32
    %c0_i32_0 = arith.constant 0 : i32
    %c0_i32_1 = arith.constant 0 : i32
    return %c0_i32, %c0_i32_0 : i32, i32
  }
  func.func @transform_6(%arg0: i32) -> (i32, i32) {
    %c0_i32 = arith.constant 0 : i32
    %c0_i32_0 = arith.constant 0 : i32
    %c0_i32_1 = arith.constant 0 : i32
    return %c0_i32, %c0_i32_0 : i32, i32
  }
  func.func @transform_7(%arg0: i32) -> (i32, i32) {
    %c0_i32 = arith.constant 0 : i32
    %c0_i32_0 = arith.constant 0 : i32
    %c0_i32_1 = arith.constant 0 : i32
    return %c0_i32, %c0_i32_0 : i32, i32
  }
  func.func @transform_8(%arg0: i32) -> (i32, i32) {
    %c0_i32 = arith.constant 0 : i32
    %c0_i32_0 = arith.constant 0 : i32
    %c0_i32_1 = arith.constant 0 : i32
    return %c0_i32, %c0_i32_0 : i32, i32
  }
  func.func @transform_9(%arg0: i32) -> (i32, i32) {
    %c0_i32 = arith.constant 0 : i32
    %c0_i32_0 = arith.constant 0 : i32
    return %arg0, %c0_i32 : i32, i32
  }
}

</mosaic_0001>

<llo_original>
// kernel: tpu_custom_call.1
$region0: #{tpu_custom_call.1}
  #allocation0 [shape = 'u32[]', space=smem, size = 0x4, offset = 0x4, fixed_abs, tag = 'smem constant byte address 0x4 - core index']
  #allocation1 [shape = 'u32[72,128]{1,0:T(1,128)}', space=vmem, size = 0x9000, scoped, tag = 'internal scratch']
  %s0 = inlined_call_operand.vmem [shape: bf16[8,32], index: 0, kind: input, shape index: {}]
  %s1 = inlined_call_operand.vmem [shape: bf16[8,19], index: 1, kind: input, shape index: {}]
  %s2 = inlined_call_operand.vmem [shape: bf16[32,64], index: 2, kind: input, shape index: {}]
  %s3 = inlined_call_operand.vmem [shape: bf16[19,64], index: 3, kind: input, shape index: {}]
  %s4 = inlined_call_operand.vmem [shape: f32[1,64], index: 4, kind: input, shape index: {}]
  %s5 = inlined_call_operand.vmem [shape: bf16[64,32], index: 5, kind: input, shape index: {}]
  %s6 = inlined_call_operand.vmem [shape: f32[1,32], index: 6, kind: input, shape index: {}]
  %s7 = inlined_call_operand.vmem [shape: bf16[32,8], index: 7, kind: input, shape index: {}]
  %s8 = inlined_call_operand.vmem [shape: f32[1,8], index: 8, kind: input, shape index: {}]
  %s9 = inlined_call_operand.hbm [shape: f32[8,8], index: 9, kind: output, shape index: {}]
  %s10 = sld [smem:[#allocation0]]
  $region46: #{tpu_custom_call.1} parent=0
    _
  %s12 = ssub.s32 1, %s10
  %s13 = scalar_select 0, %s12, %s10
  $region1: #{tpu_custom_call.1} parent=0
    #allocation2 [shape = 'u8[4096]{0}', space=vmem, size = 0x1000, scoped, tag = 'output window, operand 0, single buffered']
    #allocation3 [shape = 's32[1]{0}', space=sflag, size = 0x4, scoped, tag = 'scoped memory for tpu_custom_call.1']
    %14 = vsyncpa [#allocation3], 0
    // Predicated region
    $region2: #{tpu_custom_call.1} parent=1 // pred_check
      _
    $region3: #{tpu_custom_call.1} parent=1 // pred_check_branch
      %16 = sbr.rel (0) target = $region5
    $region4: #{tpu_custom_call.1} parent=1 // pred_region
      _
    $region5: #{tpu_custom_call.1} parent=1 // pred_fallthru
      _
    // Predicated region
    $region6: #{tpu_custom_call.1} parent=1 // pred_check
      _
    $region7: #{tpu_custom_call.1} parent=1 // pred_check_branch
      %18 = sbr.rel (0) target = $region9
    $region8: #{tpu_custom_call.1} parent=1 // pred_region
      _
    $region9: #{tpu_custom_call.1} parent=1 // pred_fallthru
      _
    // Predicated region
    $region10: #{tpu_custom_call.1} parent=1 // pred_check
      _
    $region11: #{tpu_custom_call.1} parent=1 // pred_check_branch
      %20 = sbr.rel (0) target = $region13
    $region12: #{tpu_custom_call.1} parent=1 // pred_region
      _
    $region13: #{tpu_custom_call.1} parent=1 // pred_fallthru
      _
    // Predicated region
    $region14: #{tpu_custom_call.1} parent=1 // pred_check
      _
    $region15: #{tpu_custom_call.1} parent=1 // pred_check_branch
      %22 = sbr.rel (0) target = $region17
    $region16: #{tpu_custom_call.1} parent=1 // pred_region
      _
    $region17: #{tpu_custom_call.1} parent=1 // pred_fallthru
      _
    // Predicated region
    $region18: #{tpu_custom_call.1} parent=1 // pred_check
      _
    $region19: #{tpu_custom_call.1} parent=1 // pred_check_branch
      %24 = sbr.rel (0) target = $region21
    $region20: #{tpu_custom_call.1} parent=1 // pred_region
      _
    $region21: #{tpu_custom_call.1} parent=1 // pred_fallthru
      _
    // Predicated region
    $region22: #{tpu_custom_call.1} parent=1 // pred_check
      _
    $region23: #{tpu_custom_call.1} parent=1 // pred_check_branch
      %26 = sbr.rel (0) target = $region25
    $region24: #{tpu_custom_call.1} parent=1 // pred_region
      _
    $region25: #{tpu_custom_call.1} parent=1 // pred_fallthru
      _
    // Predicated region
    $region26: #{tpu_custom_call.1} parent=1 // pred_check
      _
    $region27: #{tpu_custom_call.1} parent=1 // pred_check_branch
      %28 = sbr.rel (0) target = $region29
    $region28: #{tpu_custom_call.1} parent=1 // pred_region
      _
    $region29: #{tpu_custom_call.1} parent=1 // pred_fallthru
      _
    // Predicated region
    $region30: #{tpu_custom_call.1} parent=1 // pred_check
      _
    $region31: #{tpu_custom_call.1} parent=1 // pred_check_branch
      %30 = sbr.rel (0) target = $region33
    $region32: #{tpu_custom_call.1} parent=1 // pred_region
      _
    $region33: #{tpu_custom_call.1} parent=1 // pred_fallthru
      _
    // Predicated region
    $region34: #{tpu_custom_call.1} parent=1 // pred_check
      _
    $region35: #{tpu_custom_call.1} parent=1 // pred_check_branch
      %32 = sbr.rel (0) target = $region37
    $region36: #{tpu_custom_call.1} parent=1 // pred_region
      _
    $region37: #{tpu_custom_call.1} parent=1 // pred_fallthru
      _
    %v34 = vld [vmem:[%s2] sm:$0xf]
    %v35 = vld [vmem:[%s2 + $0x4] sm:$0xf]
    %v36 = vld [vmem:[%s2 + $0x8] sm:$0xf]
    %v37 = vld [vmem:[%s2 + $0xc] sm:$0xf]
    %v38 = vld [vmem:[%s3] sm:$0xf]
    %v39 = vld [vmem:[%s3 + $0x4] sm:$0xf]
    %v40 = vld [vmem:[%s3 + $0x8] sm:$0x3]
    %v41 = vld [vmem:[%s4] sm:$0x1]
    %v42 = vld [vmem:[%s0] sm:$0xf]
    %v43 = vld [vmem:[%s1] sm:$0xf]
    %v47 = vunpack.c.l.b16 %v38
    %v48 = vunpack.c.l.b16 %v39
    %v49 = vunpack.c.l.b16 %v40
    %v50 = vpack.c.b16 %v48, %v47
    %v51 = vpack.c.b16 %v49, %v49
    %vm53 = vcmask 154624
    %v55 = vsel %vm53, %v43, 0
    %vm57 = vcmask 1040384
    %vm58 = vcmask 1041408
    %v59 = vsel %vm57, 4294967295, 65535
    %v60 = vsel %vm58, %v59, 0
    %v62 = vand.u32 %v51, %v60
    %64 = vmatpush.bf16.msra.mxu0 0
    %65 = vmatpush.bf16.msra.mxu0 0
    %66 = vmatpush.bf16.msra.mxu0 0
    %67 = vmatpush.bf16.msra.mxu0 0
    %68 = vmatpush.bf16.msra.mxu0 0
    %69 = vmatpush.bf16.msra.mxu0 0
    %70 = vmatpush.bf16.msra.mxu0 %v62
    %71 = vmatpush.bf16.msra.mxu0 %v50
    %72 = vmatmul.bf16.gmra.mxu0 %v55
    %v73 = vpop.f32.mrf.mxu0
    %v74 = vadd.f32 0.0, %v73
    %v75 = vpop.f32.mrf.mxu0
    %76 = vdwg.mxu0
    %v81 = vunpack.c.l.b16 %v34
    %v82 = vunpack.c.l.b16 %v35
    %v83 = vunpack.c.l.b16 %v36
    %v84 = vunpack.c.l.b16 %v37
    %v85 = vpack.c.b16 %v82, %v81
    %v86 = vpack.c.b16 %v84, %v83
    %vm89 = vcmask 261120
    %v91 = vsel %vm89, %v42, 0
    %93 = vmatpush.bf16.msra.mxu0 0
    %94 = vmatpush.bf16.msra.mxu0 0
    %95 = vmatpush.bf16.msra.mxu0 0
    %96 = vmatpush.bf16.msra.mxu0 0
    %97 = vmatpush.bf16.msra.mxu0 0
    %98 = vmatpush.bf16.msra.mxu0 0
    %99 = vmatpush.bf16.msra.mxu0 %v86
    %100 = vmatpush.bf16.msra.mxu0 %v85
    %101 = vmatmul.bf16.gmra.mxu0 %v91
    %v102 = vpop.f32.mrf.mxu0
    %v103 = vadd.f32 %v74, %v102
    %v104 = vpop.f32.mrf.mxu0
    %105 = vdwg.mxu0
    %v107 = vperm.slane %v41, 0
    %v109 = vadd.f32 %v103, %v107
    %vm110 = vcmp.gt.f32.partialorder %v109, 0.0
    %v111 = vmul.f32 %v109, 0.01
    %v112 = vsel %vm110, %v109, %v111
    %v113 = vld [vmem:[%s5] sm:$0xf]
    %v114 = vld [vmem:[%s5 + $0x4] sm:$0xf]
    %v115 = vld [vmem:[%s5 + $0x8] sm:$0xf]
    %v116 = vld [vmem:[%s5 + $0xc] sm:$0xf]
    %v117 = vld [vmem:[%s5 + $0x10] sm:$0xf]
    %v118 = vld [vmem:[%s5 + $0x14] sm:$0xf]
    %v119 = vld [vmem:[%s5 + $0x18] sm:$0xf]
    %v120 = vld [vmem:[%s5 + $0x1c] sm:$0xf]
    %v121 = vld [vmem:[%s6] sm:$0x1]
    %v122 = vpack.c.bf16 %v112, %v112
    %v124 = vperm.slane %v121, 0
    %v134 = vunpack.c.l.b16 %v113
    %v135 = vunpack.c.l.b16 %v114
    %v136 = vunpack.c.l.b16 %v115
    %v137 = vunpack.c.l.b16 %v116
    %v138 = vunpack.c.l.b16 %v117
    %v139 = vunpack.c.l.b16 %v118
    %v140 = vunpack.c.l.b16 %v119
    %v141 = vunpack.c.l.b16 %v120
    %v142 = vpack.c.b16 %v135, %v134
    %v143 = vpack.c.b16 %v137, %v136
    %v144 = vpack.c.b16 %v139, %v138
    %v145 = vpack.c.b16 %v141, %v140
    %vm150 = vcmask 523264
    %v152 = vsel %vm150, %v122, 0
    %154 = vmatpush.bf16.msra.mxu0 0
    %155 = vmatpush.bf16.msra.mxu0 0
    %156 = vmatpush.bf16.msra.mxu0 0
    %157 = vmatpush.bf16.msra.mxu0 0
    %158 = vmatpush.bf16.msra.mxu0 %v145
    %159 = vmatpush.bf16.msra.mxu0 %v144
    %160 = vmatpush.bf16.msra.mxu0 %v143
    %161 = vmatpush.bf16.msra.mxu0 %v142
    %162 = vmatmul.bf16.gmra.mxu0 %v152
    %v163 = vpop.f32.mrf.mxu0
    %v164 = vadd.f32 %v124, %v163
    %v165 = vpop.f32.mrf.mxu0
    %166 = vdwg.mxu0
    %vm167 = vcmp.gt.f32.partialorder %v164, 0.0
    %v168 = vmul.f32 %v164, 0.01
    %v169 = vsel %vm167, %v164, %v168
    %v170 = vld [vmem:[%s7] sm:$0xf]
    %v171 = vld [vmem:[%s7 + $0x4] sm:$0xf]
    %v172 = vld [vmem:[%s7 + $0x8] sm:$0xf]
    %v173 = vld [vmem:[%s7 + $0xc] sm:$0xf]
    %v174 = vld [vmem:[%s8] sm:$0x1]
    %v175 = vpack.c.bf16 %v169, %v169
    %v177 = vperm.slane %v174, 0
    %v183 = vunpack.c.l.b16 %v170
    %v184 = vunpack.c.l.b16 %v171
    %v185 = vunpack.c.l.b16 %v172
    %v186 = vunpack.c.l.b16 %v173
    %v187 = vpack.c.b16 %v184, %v183
    %v188 = vpack.c.b16 %v186, %v185
    %v192 = vsel %vm89, %v175, 0
    %194 = vmatpush.bf16.msra.mxu0 0
    %195 = vmatpush.bf16.msra.mxu0 0
    %196 = vmatpush.bf16.msra.mxu0 0
    %197 = vmatpush.bf16.msra.mxu0 0
    %198 = vmatpush.bf16.msra.mxu0 0
    %199 = vmatpush.bf16.msra.mxu0 0
    %200 = vmatpush.bf16.msra.mxu0 %v188
    %201 = vmatpush.bf16.msra.mxu0 %v187
    %202 = vmatmul.bf16.gmra.mxu0 %v192
    %v203 = vpop.f32.mrf.mxu0
    %v204 = vadd.f32 %v177, %v203
    %v205 = vpop.f32.mrf.mxu0
    %206 = vdwg.mxu0
    %v207 = vsub.f32 0.0, %v204
    %v208 = vmul.f32 %v207, 1.442695
    %v209 = vpow.pop %v208
    %v210 = vadd.f32 %v209, 1.0
    %v211 = vrcp.pop %v210
    %vm212 = vcmask 64512
    %213 = vst.msk [vmem:[#allocation2] sm:$0xff] %vm212, %v211
    // Predicated region
    $region38: #{tpu_custom_call.1} parent=1 // pred_check
      _
    $region39: #{tpu_custom_call.1} parent=1 // pred_check_branch
      %215 = sbr.rel (0) target = $region41
    $region40: #{tpu_custom_call.1} parent=1 // pred_region
      %217 = vsyncadd [#allocation3], 0
      %s219 = sshll.u32 [#allocation2], 4
      %s220 = int_to_ptr.vmem [resolvable:$true] %s219
      %s221 = sshll.u32 %s9, 4
      %s222 = int_to_ptr.hbm [resolvable:$true] %s221
      %224 = dma.vmem_to_hbm [thread:$0]  %s220, 128, %s222, [#allocation3]
    $region41: #{tpu_custom_call.1} parent=1 // pred_fallthru
      _
    // Predicated region
    $region42: #{tpu_custom_call.1} parent=1 // pred_check
      _
    $region43: #{tpu_custom_call.1} parent=1 // pred_check_branch
      %226 = sbr.rel (0) target = $region45
    $region44: #{tpu_custom_call.1} parent=1 // pred_region
      %228 = dma.done [#allocation3], 128
    $region45: #{tpu_custom_call.1} parent=1 // pred_fallthru
      _
    %229 = vsyncpa [#allocation3], 1

</llo_original>
